<compile_context>
chip_gen: v6e
topology: v6e:2x2x1
jax: 0.10.0
libtpu: 0.0.40
codegen_flags: <defaults>
</compile_context>

<pallas_src>
import functools
import math

import jax
import jax.numpy as jnp
from jax.experimental import pallas as pl
from jax.experimental.pallas import tpu as pltpu


def _round_up(n: int, m: int) -> int:
    return ((n + m - 1) // m) * m


def _pick_divisor_tile(n: int, max_tile: int, multiple: int) -> int:
    """Largest tile <= max_tile that is a multiple of `multiple` and divides n.

    Falls back to the full dimension if n <= max_tile (or no divisor exists),
    which always satisfies the (8, 128) block constraints.
    """
    if n <= max_tile:
        return n
    best = None
    for t in range(multiple, max_tile + 1, multiple):
        if n % t == 0:
            best = t
    return best if best is not None else n


def _default_vmem_limit() -> int:
    """~3/4 of physical VMEM: ~96 MiB on v5e/v6e (128 MiB), ~48 MiB on v7x (64 MiB)."""
    try:
        info = pltpu.get_tpu_info()
        cap = int(getattr(info, "vmem_capacity_bytes", 0) or 0)
        if cap > 0:
            return (cap * 3) // 4
    except Exception:
        pass
    return 64 * 1024 * 1024


# ----------------------------------------------------------------------------
# Row/column-tiled linear:  y = x @ W + b   (bf16 MXU feeds, f32 accumulation)
# ----------------------------------------------------------------------------
def _linear_kernel(x_ref, w_ref, b_ref, o_ref):
    x = x_ref[...].astype(jnp.bfloat16)                         # (tile_rows, K)
    acc = jnp.dot(x, w_ref[...], preferred_element_type=jnp.float32)
    o_ref[...] = (acc + b_ref[...]).astype(o_ref.dtype)


def _linear(x2, w, b, *, out_dtype, vmem_limit,
            tile_rows_hint=512, tile_cols_hint=512):
    """x2: (N, K), w: (K, M) f32, b: (M,) f32 -> (N, M) out_dtype."""
    N, K = x2.shape
    M = w.shape[1]

    n8 = _round_up(N, 8)
    tile_rows = _pick_divisor_tile(n8, tile_rows_hint, 8)
    if n8 != N:
        x2 = jnp.pad(x2, ((0, n8 - N), (0, 0)))
    tile_cols = _pick_divisor_tile(M, tile_cols_hint, 128)

    w_bf16 = w.astype(jnp.bfloat16)          # MXU peak is bf16; accumulate in f32.
    b2 = b.reshape(1, M).astype(jnp.float32)

    cost = pl.CostEstimate(
        flops=2 * n8 * K * M,
        transcendentals=0,
        bytes_accessed=(x2.dtype.itemsize * n8 * K
                        + 2 * K * M + 4 * M
                        + jnp.dtype(out_dtype).itemsize * n8 * M),
    )

    out = pl.pallas_call(
        _linear_kernel,
        out_shape=jax.ShapeDtypeStruct((n8, M), out_dtype),
        grid_spec=pltpu.PrefetchScalarGridSpec(
            num_scalar_prefetch=0,
            grid=(n8 // tile_rows, M // tile_cols),
            in_specs=[
                pl.BlockSpec((tile_rows, K), lambda i, j: (i, 0)),     # x rows
                pl.BlockSpec((K, tile_cols), lambda i, j: (0, j)),     # W columns
                pl.BlockSpec((1, tile_cols), lambda i, j: (0, j)),     # bias
            ],
            out_specs=pl.BlockSpec((tile_rows, tile_cols), lambda i, j: (i, j)),
        ),
        compiler_params=pltpu.CompilerParams(
            dimension_semantics=("parallel", "parallel"),
            vmem_limit_bytes=vmem_limit,
        ),
        cost_estimate=cost,
    )(x2, w_bf16, b2)
    return out[:N]


# ----------------------------------------------------------------------------
# Attention core: all heads of one batch element (and one q-row tile) per step.
# Reads the fused qkv buffer directly; writes ctx in (S, H*Dh) layout.
# ----------------------------------------------------------------------------
def _attn_core_kernel(*refs, num_heads, head_dim, scale, separate_q):
    if separate_q:
        q_ref, kv_ref, ctx_ref, w_ref = refs
    else:
        kv_ref, ctx_ref, w_ref = refs
        q_ref = kv_ref

    E = num_heads * head_dim
    ctx_parts = []
    for h in range(num_heads):
        off = h * head_dim
        # Fold the 1/sqrt(Dh) scale into q before the MXU feed (per perf review).
        q = (q_ref[0, :, off:off + head_dim].astype(jnp.float32) * scale
             ).astype(jnp.bfloat16)                                   # (tq, Dh)
        k = kv_ref[0, :, E + off:E + off + head_dim]                  # (S, Dh) bf16
        v = kv_ref[0, :, 2 * E + off:2 * E + off + head_dim]          # (S, Dh) bf16

        s = jnp.einsum("qd,kd->qk", q, k,
                       preferred_element_type=jnp.float32)            # (tq, S) f32

        # numerically-stable softmax; reciprocal on the EUP, multiply on VPU.
        m = jnp.max(s, axis=-1, keepdims=True)
        p = jnp.exp(s - m)
        denom = jnp.sum(p, axis=-1, keepdims=True)
        attn = p * pl.reciprocal(denom, approx=True)                  # (tq, S) f32

        w_ref[0, h] = attn.astype(w_ref.dtype)
        ctx_parts.append(
            jnp.dot(attn.astype(jnp.bfloat16), v,
                    preferred_element_type=jnp.float32))              # (tq, Dh) f32

    # Single lane-dense store of the concatenated heads -> ctx already in
    # (S, H*Dh) layout, so no host-side transpose is needed afterwards.
    ctx = jnp.concatenate(ctx_parts, axis=-1)                         # (tq, E)
    ctx_ref[0] = ctx.astype(ctx_ref.dtype)


def _attention_core(qkv3, *, num_heads, head_dim, scale, weight_dtype,
                    vmem_limit, tq_hint=256):
    """qkv3: (B, S, 3E) bf16 -> ctx (B, S, E) bf16, weights (B, H, S, S)."""
    B, S, threeE = qkv3.shape
    E = num_heads * head_dim

    tq = _pick_divisor_tile(S, tq_hint, 8)
    separate_q = tq != S          # q-row tiling only kicks in for long sequences

    cost = pl.CostEstimate(
        flops=4 * B * num_heads * S * S * head_dim,
        transcendentals=B * num_heads * S * S,
        bytes_accessed=(qkv3.dtype.itemsize * B * S * threeE * (2 if separate_q else 1)
                        + 2 * B * S * E
                        + jnp.dtype(weight_dtype).itemsize * B * num_heads * S * S),
    )

    kernel = functools.partial(
        _attn_core_kernel, num_heads=num_heads, head_dim=head_dim,
        scale=scale, separate_q=separate_q)

    out_shape = (
        jax.ShapeDtypeStruct((B, S, E), jnp.bfloat16),
        jax.ShapeDtypeStruct((B, num_heads, S, S), weight_dtype),
    )

    if separate_q:
        grid = (B, S // tq)
        in_specs = [
            pl.BlockSpec((1, tq, threeE), lambda b, i: (b, i, 0)),     # q row tile
            pl.BlockSpec((1, S, threeE), lambda b, i: (b, 0, 0)),      # full k/v
        ]
        out_specs = [
            pl.BlockSpec((1, tq, E), lambda b, i: (b, i, 0)),
            pl.BlockSpec((1, num_heads, tq, S), lambda b, i: (b, 0, i, 0)),
        ]
        operands = (qkv3, qkv3)
        dims = ("parallel", "parallel")
    else:
        grid = (B,)
        in_specs = [pl.BlockSpec((1, S, threeE), lambda b: (b, 0, 0))]
        out_specs = [
            pl.BlockSpec((1, S, E), lambda b: (b, 0, 0)),
            pl.BlockSpec((1, num_heads, S, S), lambda b: (b, 0, 0, 0)),
        ]
        operands = (qkv3,)
        dims = ("parallel",)

    ctx, wts = pl.pallas_call(
        kernel,
        out_shape=out_shape,
        grid_spec=pltpu.PrefetchScalarGridSpec(
            num_scalar_prefetch=0,
            grid=grid,
            in_specs=in_specs,
            out_specs=out_specs,
        ),
        compiler_params=pltpu.CompilerParams(
            dimension_semantics=dims,
            vmem_limit_bytes=vmem_limit,
        ),
        cost_estimate=cost,
    )(*operands)
    return ctx, wts


# ----------------------------------------------------------------------------
# Attention.forward(x) -> (attention_value, attention_weight)
# ----------------------------------------------------------------------------
def attention_forward(x, w_qkv, b_qkv, w_out, b_out, *, num_heads,
                      weight_dtype=jnp.bfloat16):
    """weight_dtype=jnp.float32 restores the exact module output dtype; bf16
    halves the attention-weight writeback traffic (values match within tol)."""
    B, S, E = x.shape
    H = num_heads
    Dh = E // H
    assert Dh * H == E

    vmem_limit = _default_vmem_limit()
    x2 = x.reshape(B * S, E)

    # Fused QKV projection; bf16 intermediate (halves qkv HBM traffic).
    qkv = _linear(x2, w_qkv, b_qkv, out_dtype=jnp.bfloat16,
                  vmem_limit=vmem_limit)                       # (B*S, 3E) bf16
    qkv3 = qkv.reshape(B, S, 3 * E)                            # free reshape, no transpose

    ctx, attention_weight = _attention_core(
        qkv3, num_heads=H, head_dim=Dh, scale=1.0 / math.sqrt(Dh),
        weight_dtype=weight_dtype, vmem_limit=vmem_limit)

    # ctx is already (B, S, H*Dh) — straight into the output projection.
    value = _linear(ctx.reshape(B * S, E), w_out, b_out,
                    out_dtype=jnp.float32, vmem_limit=vmem_limit).reshape(B, S, E)

    return value, attention_weight


# ----------------------------------------------------------------------------
# Pure-JAX reference
# ----------------------------------------------------------------------------
def attention_ref(x, w_qkv, b_qkv, w_out, b_out, *, num_heads):
    B, S, E = x.shape
    H = num_heads
    Dh = E // H
    qkv = x.reshape(B * S, E) @ w_qkv + b_qkv
    qkv = qkv.reshape(B, S, 3, H, Dh).transpose(2, 0, 3, 1, 4)
    q, k, v = qkv[0], qkv[1], qkv[2]                           # (B, H, S, Dh)
    scores = jnp.einsum("bhqd,bhkd->bhqk", q, k) / math.sqrt(Dh)
    attn = jax.nn.softmax(scores, axis=-1)
    ctx = jnp.einsum("bhqk,bhkd->bhqd", attn, v)
    ctx = ctx.transpose(0, 2, 1, 3).reshape(B * S, E)
    value = (ctx @ w_out + b_out).reshape(B, S, E)
    return value, attn


if __name__ == "__main__":
    B, S, E, H = 2, 8, 32, 4
    key = jax.random.PRNGKey(0)
    kx, k1, k2, k3, k4 = jax.random.split(key, 5)

    x = jax.random.normal(kx, (B, S, E), dtype=jnp.float32)
    w_qkv = jax.random.normal(k1, (E, 3 * E), dtype=jnp.float32) / jnp.sqrt(E)
    b_qkv = jax.random.normal(k2, (3 * E,), dtype=jnp.float32) * 0.01
    w_out = jax.random.normal(k3, (E, E), dtype=jnp.float32) / jnp.sqrt(E)
    b_out = jax.random.normal(k4, (E,), dtype=jnp.float32) * 0.01

    value, weight = attention_forward(x, w_qkv, b_qkv, w_out, b_out, num_heads=H)
    value = jax.block_until_ready(value)
    weight = jax.block_until_ready(weight)

    ref_value, ref_weight = attention_ref(x, w_qkv, b_qkv, w_out, b_out, num_heads=H)

    assert value.shape == (B, S, E)
    assert weight.shape == (B, H, S, S)
    # bf16 MXU feeds + bf16 intermediates -> loosened tolerance vs f32 reference.
    assert jnp.allclose(value, ref_value, atol=5e-2, rtol=5e-2), "value mismatch"
    assert jnp.allclose(weight.astype(jnp.float32), ref_weight,
                        atol=5e-2, rtol=5e-2), "weight mismatch"

    print("KERNEL_OK")
</pallas_src>

<mosaic_0001>
module attributes {stable_mosaic.version = 11 : i64} {
  func.func @_linear_kernel(%arg0: i32, %arg1: i32, %arg2: memref<16x32xf32, #tpu.memory_space<vmem>>, %arg3: memref<32x96xbf16, #tpu.memory_space<vmem>>, %arg4: memref<1x96xf32, #tpu.memory_space<vmem>>, %arg5: memref<16x96xbf16, #tpu.memory_space<vmem>>) attributes {dimension_semantics = [#tpu.dimension_semantics<parallel>, #tpu.dimension_semantics<parallel>], iteration_bounds = array<i64: 1, 1>, scalar_prefetch = 0 : i64, scratch_operands = 0 : i64, tpu.core_type = #tpu.core_type<tc>, window_params = [{transform_indices = @transform_0, window_bounds = array<i64: 16, 32>}, {transform_indices = @transform_1, window_bounds = array<i64: 32, 96>}, {transform_indices = @transform_2, window_bounds = array<i64: 1, 96>}, {transform_indices = @transform_3, window_bounds = array<i64: 16, 96>}]} {
    %c0 = arith.constant 0 : index
    %c0_0 = arith.constant 0 : index
    %0 = vector.load %arg2[%c0, %c0_0] : memref<16x32xf32, #tpu.memory_space<vmem>>, vector<16x32xf32>
    %1 = arith.truncf %0 : vector<16x32xf32> to vector<16x32xbf16>
    %c0_1 = arith.constant 0 : index
    %c0_2 = arith.constant 0 : index
    %2 = vector.load %arg3[%c0_1, %c0_2] : memref<32x96xbf16, #tpu.memory_space<vmem>>, vector<32x96xbf16>
    %cst = arith.constant dense<0.000000e+00> : vector<16x96xf32>
    %3 = tpu.matmul %1, %2, %cst {dimension_numbers = #tpu.dot_dimension_numbers<[1], [0], [0], [1], [0, 0, 1, 1], [], []>} : vector<16x32xbf16>, vector<32x96xbf16>, vector<16x96xf32> -> vector<16x96xf32>
    %c0_3 = arith.constant 0 : index
    %c0_4 = arith.constant 0 : index
    %4 = vector.load %arg4[%c0_3, %c0_4] : memref<1x96xf32, #tpu.memory_space<vmem>>, vector<1x96xf32>
    %5 = vector.broadcast %4 : vector<1x96xf32> to vector<16x96xf32>
    %6 = arith.addf %3, %5 : vector<16x96xf32>
    %7 = arith.truncf %6 : vector<16x96xf32> to vector<16x96xbf16>
    %c0_5 = arith.constant 0 : index
    %c0_6 = arith.constant 0 : index
    %8 = vector.load %arg5[%c0_5, %c0_6] : memref<16x96xbf16, #tpu.memory_space<vmem>>, vector<16x96xbf16>
    tpu.vector_store %arg5[%c0_5, %c0_6], %7 {strides = array<i32>} : memref<16x96xbf16, #tpu.memory_space<vmem>>, vector<16x96xbf16>,
    return
  }
  func.func @transform_0(%arg0: i32, %arg1: i32) -> (i32, i32) {
    %c0_i32 = arith.constant 0 : i32
    %c0_i32_0 = arith.constant 0 : i32
    return %arg0, %c0_i32 : i32, i32
  }
  func.func @transform_1(%arg0: i32, %arg1: i32) -> (i32, i32) {
    %c0_i32 = arith.constant 0 : i32
    %c0_i32_0 = arith.constant 0 : i32
    return %c0_i32, %arg1 : i32, i32
  }
  func.func @transform_2(%arg0: i32, %arg1: i32) -> (i32, i32) {
    %c0_i32 = arith.constant 0 : i32
    %c0_i32_0 = arith.constant 0 : i32
    return %c0_i32, %arg1 : i32, i32
  }
  func.func @transform_3(%arg0: i32, %arg1: i32) -> (i32, i32) {
    %c0_i32 = arith.constant 0 : i32
    return %arg0, %arg1 : i32, i32
  }
}

</mosaic_0001>

<llo_original>
// kernel: tpu_custom_call.1
$region0: #{tpu_custom_call.1}
  #allocation0 [shape = 'u32[]', space=smem, size = 0x4, offset = 0x4, fixed_abs, tag = 'smem constant byte address 0x4 - core index']
  #allocation1 [shape = 'u32[144,128]{1,0:T(1,128)}', space=vmem, size = 0x12000, scoped, tag = 'internal scratch']
  %s0 = inlined_call_operand.hbm [shape: f32[16,32], index: 0, kind: input, shape index: {}]
  %s1 = inlined_call_operand.hbm [shape: bf16[32,96], index: 1, kind: input, shape index: {}]
  %s2 = inlined_call_operand.vmem [shape: f32[1,96], index: 2, kind: input, shape index: {}]
  %s3 = inlined_call_operand.hbm [shape: bf16[16,96], index: 3, kind: output, shape index: {}]
  %s4 = sld [smem:[#allocation0]]
  $region30: #{tpu_custom_call.1} parent=0
    _
  %s6 = ssub.s32 1, %s4
  %s7 = scalar_select 0, %s6, %s4
  $region1: #{tpu_custom_call.1} parent=0
    #allocation2 [shape = 'u8[8192]{0}', space=vmem, size = 0x2000, scoped, tag = 'input window, operand 0, single buffered']
    #allocation3 [shape = 's32[1]{0}', space=sflag, size = 0x4, scoped, tag = 'scoped memory for tpu_custom_call.1']
    #allocation4 [shape = 's32[1]{0}', space=sflag, size = 0x4, scoped, tag = 'scoped memory for tpu_custom_call.1']
    #allocation5 [shape = 'u8[8192]{0}', space=vmem, size = 0x2000, scoped, tag = 'input window, operand 1, single buffered']
    #allocation6 [shape = 's32[1]{0}', space=sflag, size = 0x4, scoped, tag = 'scoped memory for tpu_custom_call.1']
    #allocation7 [shape = 'u8[4096]{0}', space=vmem, size = 0x1000, scoped, tag = 'output window, operand 0, single buffered']
    %8 = vsyncpa [#allocation3], 0
    %9 = vsyncpa [#allocation6], 0
    %10 = vsyncpa [#allocation4], 0
    // Predicated region
    $region2: #{tpu_custom_call.1} parent=1 // pred_check
      _
    $region3: #{tpu_custom_call.1} parent=1 // pred_check_branch
      %12 = sbr.rel (0) target = $region5
    $region4: #{tpu_custom_call.1} parent=1 // pred_region
      %s14 = ssub.s32 256, 256
      %15 = vsyncadd [#allocation3], %s14
      %s16 = sshll.u32 [#allocation2], 4
      %s17 = int_to_ptr.vmem [resolvable:$true] %s16
      %22 = dma.hbm_to_vmem [thread:$0]  %s0, 256, %s17, [#allocation3], 128, 128, 8
    $region5: #{tpu_custom_call.1} parent=1 // pred_fallthru
      _
    // Predicated region
    $region6: #{tpu_custom_call.1} parent=1 // pred_check
      _
    $region7: #{tpu_custom_call.1} parent=1 // pred_check_branch
      %24 = sbr.rel (0) target = $region9
    $region8: #{tpu_custom_call.1} parent=1 // pred_region
      %s26 = ssub.s32 256, 256
      %27 = vsyncadd [#allocation6], %s26
      %s28 = sshll.u32 [#allocation5], 4
      %s29 = int_to_ptr.vmem [resolvable:$true] %s28
      %34 = dma.hbm_to_vmem [thread:$0]  %s1, 256, %s29, [#allocation6], 64, 64, 4
    $region9: #{tpu_custom_call.1} parent=1 // pred_fallthru
      _
    // Predicated region
    $region10: #{tpu_custom_call.1} parent=1 // pred_check
      _
    $region11: #{tpu_custom_call.1} parent=1 // pred_check_branch
      %36 = sbr.rel (0) target = $region13
    $region12: #{tpu_custom_call.1} parent=1 // pred_region
      _
    $region13: #{tpu_custom_call.1} parent=1 // pred_fallthru
      _
    // Predicated region
    $region14: #{tpu_custom_call.1} parent=1 // pred_check
      _
    $region15: #{tpu_custom_call.1} parent=1 // pred_check_branch
      %38 = sbr.rel (0) target = $region17
    $region16: #{tpu_custom_call.1} parent=1 // pred_region
      %39 = dma.done [#allocation3], 256
    $region17: #{tpu_custom_call.1} parent=1 // pred_fallthru
      _
    // Predicated region
    $region18: #{tpu_custom_call.1} parent=1 // pred_check
      _
    $region19: #{tpu_custom_call.1} parent=1 // pred_check_branch
      %41 = sbr.rel (0) target = $region21
    $region20: #{tpu_custom_call.1} parent=1 // pred_region
      %42 = dma.done [#allocation6], 256
    $region21: #{tpu_custom_call.1} parent=1 // pred_fallthru
      _
    %v44 = vld [vmem:[#allocation2] sm:$0xff]
    %v45 = vld [vmem:[#allocation2 + $0x8] sm:$0xff]
    %v46 = vpack.c.bf16 %v45, %v44
    %v47 = vld [vmem:[#allocation5] sm:$0xf]
    %v48 = vld [vmem:[#allocation5 + $0x4] sm:$0xf]
    %v49 = vld [vmem:[#allocation5 + $0x8] sm:$0xf]
    %v50 = vld [vmem:[#allocation5 + $0xc] sm:$0xf]
    %v51 = vld [vmem:[%s2] sm:$0x1]
    %v53 = vlaneseq
    %v54 = vshrl.u32 %v53, 7
    %v55 = vsub.s32 0, %v54
    %v56 = vrot.slane %v51, %v55
    %v62 = vunpack.c.l.b16 %v47
    %v63 = vunpack.c.l.b16 %v48
    %v64 = vunpack.c.l.b16 %v49
    %v65 = vunpack.c.l.b16 %v50
    %v66 = vpack.c.b16 %v63, %v62
    %v67 = vpack.c.b16 %v65, %v64
    %vm70 = vcmask 261120
    %v72 = vsel %vm70, %v46, 0
    %74 = vmatprep.subr.bf16.mxu0 0
    %75 = vmatpush1.bf16.msra.mxu0 0
    %76 = vmatprep.subr.bf16.mxu0 0
    %77 = vmatpush1.bf16.msra.mxu0 0
    %78 = vmatprep.subr.bf16.mxu0 0
    %79 = vmatpush1.bf16.msra.mxu0 0
    %80 = vmatprep.subr.bf16.mxu0 0
    %81 = vmatpush1.bf16.msra.mxu0 0
    %82 = vmatprep.subr.bf16.mxu0 0
    %83 = vmatpush1.bf16.msra.mxu0 0
    %84 = vmatprep.subr.bf16.mxu0 0
    %85 = vmatpush1.bf16.msra.mxu0 0
    %86 = vmatprep.subr.bf16.mxu0 0
    %87 = vmatpush1.bf16.msra.mxu0 %v67
    %88 = vmatprep.subr.bf16.mxu0 0
    %89 = vmatpush1.bf16.msra.mxu0 %v66
    %90 = vmatprep.subr.bf16.mxu0 0
    %91 = vmatpush2.bf16.msra.mxu0 0
    %92 = vmatprep.subr.bf16.mxu0 0
    %93 = vmatpush2.bf16.msra.mxu0 0
    %94 = vmatprep.subr.bf16.mxu0 0
    %95 = vmatpush2.bf16.msra.mxu0 0
    %96 = vmatprep.subr.bf16.mxu0 0
    %97 = vmatpush2.bf16.msra.mxu0 0
    %98 = vmatprep.subr.bf16.mxu0 0
    %99 = vmatpush2.bf16.msra.mxu0 0
    %100 = vmatprep.subr.bf16.mxu0 0
    %101 = vmatpush2.bf16.msra.mxu0 0
    %102 = vmatprep.subr.bf16.mxu0 0
    %103 = vmatpush2.bf16.msra.mxu0 0
    %104 = vmatprep.subr.bf16.mxu0 0
    %105 = vmatpush2.bf16.msra.mxu0 0
    %106 = vmatprep.mubr.bf16.mxu0 0
    %107 = vmatmul.mubr.bf16.gmra.mxu0 %v72
    %v108 = vpop.f32.mrf.mxu0
    %v109 = vadd.f32 %v56, %v108
    %v110 = vpop.f32.mrf.mxu0
    %v111 = vpop.f32.mrf.mxu0
    %v112 = vadd.f32 %v56, %v111
    %v113 = vpop.f32.mrf.mxu0
    %114 = vdwg.mxu0
    %v115 = vpack.c.bf16 %v112, %v109
    %v117 = vunpack.c.l.b16 %v115
    %v118 = vunpack.c.h.b16 %v115
    %v119 = vpack.c.b16 %v117, %v117
    %v120 = vpack.c.b16 %v118, %v118
    %vm123 = vcmask 781312
    %124 = vst.msk [vmem:[#allocation7] sm:$0xf] %vm123, %v119
    %125 = vst.msk [vmem:[#allocation7 + $0x4] sm:$0xf] %vm123, %v120
    // Predicated region
    $region22: #{tpu_custom_call.1} parent=1 // pred_check
      _
    $region23: #{tpu_custom_call.1} parent=1 // pred_check_branch
      %127 = sbr.rel (0) target = $region25
    $region24: #{tpu_custom_call.1} parent=1 // pred_region
      %s129 = ssub.s32 128, 128
      %130 = vsyncadd [#allocation4], %s129
      %s131 = sshll.u32 [#allocation7], 4
      %s132 = int_to_ptr.vmem [resolvable:$true] %s131
      %137 = dma.vmem_to_hbm [thread:$0]  %s132, 128, %s3, [#allocation4], 64, 64, 4
    $region25: #{tpu_custom_call.1} parent=1 // pred_fallthru
      _
    // Predicated region
    $region26: #{tpu_custom_call.1} parent=1 // pred_check
      _
    $region27: #{tpu_custom_call.1} parent=1 // pred_check_branch
      %139 = sbr.rel (0) target = $region29
    $region28: #{tpu_custom_call.1} parent=1 // pred_region
      %140 = dma.done [#allocation4], 128
    $region29: #{tpu_custom_call.1} parent=1 // pred_fallthru
      _
    %141 = vsyncpa [#allocation3], 1
    %142 = vsyncpa [#allocation6], 1
    %143 = vsyncpa [#allocation4], 1

</llo_original>
